<compile_context>
chip_gen: v7x
topology: tpu7x:2x2x1
jax: 0.10.0
libtpu: 0.0.40
codegen_flags: <defaults>
</compile_context>

<pallas_src>
import jax
import jax.numpy as jnp
from jax.experimental import pallas as pl
from jax.experimental.pallas import tpu as pltpu


# ---------------------------------------------------------------------------
# Pallas kernel: transfer (conv1x1+BN+ReLU) followed by 2 residual blocks.
# Fully 2D: rows = packed groups of P points, lanes = P * channels.
# ---------------------------------------------------------------------------
def _local_extraction_kernel(
    x_ref,     # [R, P*Cin]        f32  (cast to bf16 in VMEM)
    wt_ref,    # [P*Cin, P*O]      bf16 (block-diag transfer weight, BN folded)
    wr_ref,    # [4, P*O, P*O]     bf16 (block-diag rb0-1, rb0-2, rb1-1, rb1-2)
    b_ref,     # [5, P*O]          f32  (transfer, rb0-1, rb0-2, rb1-1, rb1-2)
    o_ref,     # [R, P*O]          bf16 (or f32)
):
    x = x_ref[...].astype(jnp.bfloat16)

    # transfer: conv1x1 (BN folded) + ReLU   -> MXU matmul, f32 accumulate
    h = jnp.dot(x, wt_ref[...], preferred_element_type=jnp.float32)
    h = jnp.maximum(h + b_ref[0:1, :], 0.0)

    # two ResConv1dBR blocks (res_expansion = 1), statically unrolled.
    # Activations are cast to bf16 only as MXU operands; residual path,
    # accumulation and all elementwise math stay f32.
    for blk in range(2):
        w1 = wr_ref[2 * blk]
        w2 = wr_ref[2 * blk + 1]
        b1 = b_ref[1 + 2 * blk : 2 + 2 * blk, :]
        b2 = b_ref[2 + 2 * blk : 3 + 2 * blk, :]

        t = jnp.dot(h.astype(jnp.bfloat16), w1,
                    preferred_element_type=jnp.float32)
        t = jnp.maximum(t + b1, 0.0)                           # net1: conv+BN+ReLU
        u = jnp.dot(t.astype(jnp.bfloat16), w2,
                    preferred_element_type=jnp.float32) + b2   # net2: conv+BN
        h = jnp.maximum(u + h, 0.0)                            # residual + ReLU

    o_ref[...] = h.astype(o_ref.dtype)


# ---------------------------------------------------------------------------
# Wrapper helpers
# ---------------------------------------------------------------------------
def _round_up(v, m):
    return (v + m - 1) // m * m


def _preferred_lane_target():
    """Native MXU output width: 256 on v6e/v7x, 128 on v5e/unknown."""
    try:
        kind = jax.devices()[0].device_kind.lower()
    except Exception:
        kind = ""
    if any(s in kind for s in ("v6", "v7", "7x")):
        return 256
    return 128


def _choose_pack(rows, out_c):
    """Largest point-packing factor P with P*out_c <= lane target and P | rows."""
    p = max(1, _preferred_lane_target() // out_c)
    while p > 1 and rows % p != 0:
        p -= 1
    return p


def _pack_params(params, p):
    """Block-diagonalize the folded weights / tile the biases for P-point packing."""
    wt, wr, bias = params                      # f32: [d,O], [4,O,O], [5,O]
    eye = jnp.eye(p, dtype=wt.dtype)
    wt_p = jnp.kron(eye, wt).astype(jnp.bfloat16)                       # [P*d, P*O]
    wr_p = jnp.stack([jnp.kron(eye, wr[i]) for i in range(wr.shape[0])]
                     ).astype(jnp.bfloat16)                             # [4, P*O, P*O]
    b_p = jnp.tile(bias, (1, p)).astype(jnp.float32)                    # [5, P*O]
    return wt_p, wr_p, b_p


# ---------------------------------------------------------------------------
# Wrapper
# ---------------------------------------------------------------------------
def local_extraction_forward(x, params, *, target_rows=2048,
                             channels_last=False, out_dtype=jnp.bfloat16):
    """x: [b, g, k, d] float32; params = (wt [d,O], wr [4,O,O], bias [5,O]) f32.

    Returns [b*g, out_channels, k] (PyTorch layout), or [b*g, k, out_channels]
    if channels_last=True (saves an extra HBM pass for the transpose).
    `target_rows` is the packed-row tile target.
    """
    b, g, k, d = x.shape
    n = b * g
    rows = n * k
    out_c = params[0].shape[1]

    # ---- per-chip point packing (lane-dense activations / stores) ----
    p = _choose_pack(rows, out_c)
    wt_p, wr_p, b_p = _pack_params(params, p)
    lane_in, lane_out = p * d, p * out_c

    # PyTorch's permute(0,1,3,2).view(-1, d, k) is, channels-last, just a flat
    # reshape of the original contiguous x.  Packing P points per row is the
    # same metadata-only reshape (no HBM pass, no dtype cast here).
    rows_p = rows // p
    x2 = x.reshape(rows_p, lane_in)

    # ---- row-tile selection: multiple of 8, >= 4 grid steps when possible ----
    tile = min(target_rows, _round_up(rows_p, 8))
    tile = max(8, (tile // 8) * 8)
    if pl.cdiv(rows_p, tile) < 4 and rows_p >= 32:
        tile = max(8, (pl.cdiv(rows_p, 4) // 8) * 8)
    grid = pl.cdiv(rows_p, tile)          # ragged last block: OOB rows discarded

    # ---- cost estimate (packed / bf16-output shapes) ----
    out_bytes = jnp.dtype(out_dtype).itemsize
    flops = 2 * rows_p * (lane_in * lane_out + 4 * lane_out * lane_out)
    bytes_accessed = (
        rows_p * lane_in * 4                                   # x (f32)
        + (lane_in * lane_out + 4 * lane_out * lane_out) * 2   # weights (bf16)
        + 5 * lane_out * 4                                     # biases (f32)
        + rows_p * lane_out * out_bytes                        # output
    )
    cost = pl.CostEstimate(flops=flops, transcendentals=0,
                           bytes_accessed=bytes_accessed)

    out2 = pl.pallas_call(
        _local_extraction_kernel,
        out_shape=jax.ShapeDtypeStruct((rows_p, lane_out), out_dtype),
        grid_spec=pltpu.PrefetchScalarGridSpec(
            num_scalar_prefetch=0,
            grid=(grid,),
            in_specs=[
                pl.BlockSpec((tile, lane_in), lambda i: (i, 0)),
                pl.BlockSpec(wt_p.shape, lambda i: (0, 0)),      # grid-invariant
                pl.BlockSpec(wr_p.shape, lambda i: (0, 0, 0)),   # grid-invariant
                pl.BlockSpec(b_p.shape, lambda i: (0, 0)),       # grid-invariant
            ],
            out_specs=pl.BlockSpec((tile, lane_out), lambda i: (i, 0)),
        ),
        compiler_params=pltpu.CompilerParams(
            dimension_semantics=("parallel",),
        ),
        cost_estimate=cost,
    )(x2, wt_p, wr_p, b_p)

    # Un-pack: [rows_p, P*O] -> [rows, O] is bit-identical layout (free reshape).
    out3 = out2.reshape(n, k, out_c)          # channels-last [N, K, O]
    if channels_last:
        return out3
    # PyTorch layout [N, out_channels, K]; transpose left to XLA — consumers
    # able to take channels-last output should skip it.
    return jnp.transpose(out3, (0, 2, 1))


# ---------------------------------------------------------------------------
# Deterministic parameter construction (Conv1d(ks=1) + BatchNorm1d folded).
# ---------------------------------------------------------------------------
def _fold_conv_bn(key, cin, cout):
    k1, k2, k3, k4, k5, k6 = jax.random.split(key, 6)
    w = 0.1 * jax.random.normal(k1, (cout, cin), jnp.float32)     # Conv1d [O, I]
    bias = 0.1 * jax.random.normal(k2, (cout,), jnp.float32)
    gamma = 1.0 + 0.1 * jax.random.normal(k3, (cout,), jnp.float32)
    beta = 0.1 * jax.random.normal(k4, (cout,), jnp.float32)
    mean = 0.1 * jax.random.normal(k5, (cout,), jnp.float32)
    var = jax.random.uniform(k6, (cout,), jnp.float32, minval=0.5, maxval=1.5)
    eps = 1e-5
    s = gamma / jnp.sqrt(var + eps)
    w_f = (w * s[:, None]).T                    # [I, O], BN folded
    b_f = bias * s + beta - mean * s            # [O]
    return w_f, b_f


def make_params(key, in_channels, out_channels):
    ks = jax.random.split(key, 5)
    wt, bt = _fold_conv_bn(ks[0], in_channels, out_channels)        # transfer
    res_w, biases = [], [bt]
    for i in range(1, 5):                                           # rb0n1, rb0n2, rb1n1, rb1n2
        w, b2 = _fold_conv_bn(ks[i], out_channels, out_channels)
        res_w.append(w)
        biases.append(b2)
    wr = jnp.stack(res_w, axis=0)                                   # [4, O, O]
    bias = jnp.stack(biases, axis=0)                                # [5, O]
    # Base (unpacked) f32 params; per-chip packing + bf16 cast happens in the wrapper.
    return wt, wr, bias


# ---------------------------------------------------------------------------
# Pure-JAX reference with the same bf16 operand casts (tight tolerance check).
# ---------------------------------------------------------------------------
def reference_forward(x, params, out_dtype=jnp.bfloat16):
    b, g, k, d = x.shape
    wt, wr, bias = params
    h = x.reshape(b * g * k, d).astype(jnp.bfloat16)
    h = jnp.maximum(
        jnp.dot(h, wt.astype(jnp.bfloat16),
                preferred_element_type=jnp.float32) + bias[0:1], 0.0)
    for blk in range(2):
        t = jnp.maximum(
            jnp.dot(h.astype(jnp.bfloat16), wr[2 * blk].astype(jnp.bfloat16),
                    preferred_element_type=jnp.float32)
            + bias[1 + 2 * blk : 2 + 2 * blk], 0.0)
        u = (jnp.dot(t.astype(jnp.bfloat16), wr[2 * blk + 1].astype(jnp.bfloat16),
                     preferred_element_type=jnp.float32)
             + bias[2 + 2 * blk : 3 + 2 * blk])
        h = jnp.maximum(u + h, 0.0)
    h = h.astype(out_dtype)
    return jnp.transpose(h.reshape(b * g, k, -1), (0, 2, 1))


if __name__ == "__main__":
    # Small shapes consistent with LocalExtraction(in_channels=4, out_channels=32, k=20)
    b, g, k, d = 2, 4, 20, 4
    out_channels = 32

    key = jax.random.PRNGKey(0)
    kx, kp = jax.random.split(key)
    x = jax.random.normal(kx, (b, g, k, d), jnp.float32)
    params = make_params(kp, d, out_channels)

    out = local_extraction_forward(x, params)
    out = jax.block_until_ready(out)

    ref = reference_forward(x, params)
    assert out.shape == (b * g, out_channels, k), out.shape
    max_diff = float(jnp.max(jnp.abs(out.astype(jnp.float32)
                                     - ref.astype(jnp.float32))))
    assert max_diff < 2e-2, max_diff

    print("KERNEL_OK")
</pallas_src>

<mosaic_0001>
module attributes {stable_mosaic.version = 11 : i64} {
  func.func @_local_extraction_kernel(%arg0: i32, %arg1: memref<8x16xf32, #tpu.memory_space<vmem>>, %arg2: memref<16x128xbf16, #tpu.memory_space<vmem>>, %arg3: memref<4x128x128xbf16, #tpu.memory_space<vmem>>, %arg4: memref<5x128xf32, #tpu.memory_space<vmem>>, %arg5: memref<8x128xbf16, #tpu.memory_space<vmem>>) attributes {dimension_semantics = [#tpu.dimension_semantics<parallel>], iteration_bounds = array<i64: 5>, scalar_prefetch = 0 : i64, scratch_operands = 0 : i64, tpu.core_type = #tpu.core_type<tc>, window_params = [{transform_indices = @transform_0, window_bounds = array<i64: 8, 16>}, {pipeline_mode = #tpu.pipeline_mode<synchronous>, transform_indices = @transform_1, window_bounds = array<i64: 16, 128>}, {pipeline_mode = #tpu.pipeline_mode<synchronous>, transform_indices = @transform_2, window_bounds = array<i64: 4, 128, 128>}, {pipeline_mode = #tpu.pipeline_mode<synchronous>, transform_indices = @transform_3, window_bounds = array<i64: 5, 128>}, {transform_indices = @transform_4, window_bounds = array<i64: 8, 128>}]} {
    %c0 = arith.constant 0 : index
    %c0_0 = arith.constant 0 : index
    %0 = vector.load %arg1[%c0, %c0_0] : memref<8x16xf32, #tpu.memory_space<vmem>>, vector<8x16xf32>
    %1 = arith.truncf %0 : vector<8x16xf32> to vector<8x16xbf16>
    %c0_1 = arith.constant 0 : index
    %c0_2 = arith.constant 0 : index
    %2 = vector.load %arg2[%c0_1, %c0_2] : memref<16x128xbf16, #tpu.memory_space<vmem>>, vector<16x128xbf16>
    %cst = arith.constant dense<0.000000e+00> : vector<8x128xf32>
    %3 = tpu.matmul %1, %2, %cst {dimension_numbers = #tpu.dot_dimension_numbers<[1], [0], [0], [1], [0, 0, 1, 1], [], []>} : vector<8x16xbf16>, vector<16x128xbf16>, vector<8x128xf32> -> vector<8x128xf32>
    %c0_3 = arith.constant 0 : index
    %c0_4 = arith.constant 0 : index
    %4 = vector.load %arg4[%c0_3, %c0_4] : memref<5x128xf32, #tpu.memory_space<vmem>>, vector<1x128xf32>
    %5 = vector.broadcast %4 : vector<1x128xf32> to vector<8x128xf32>
    %6 = arith.addf %3, %5 : vector<8x128xf32>
    %cst_5 = arith.constant 0.000000e+00 : f32
    %7 = vector.broadcast %cst_5 : f32 to vector<8x128xf32>
    %8 = arith.maximumf %6, %7 : vector<8x128xf32>
    %c0_6 = arith.constant 0 : index
    %c0_7 = arith.constant 0 : index
    %c0_8 = arith.constant 0 : index
    %9 = vector.load %arg3[%c0_6, %c0_7, %c0_8] : memref<4x128x128xbf16, #tpu.memory_space<vmem>>, vector<1x128x128xbf16>
    %10 = vector.shape_cast %9 : vector<1x128x128xbf16> to vector<128x128xbf16>
    %c1 = arith.constant 1 : index
    %c0_9 = arith.constant 0 : index
    %c0_10 = arith.constant 0 : index
    %11 = vector.load %arg3[%c1, %c0_9, %c0_10] : memref<4x128x128xbf16, #tpu.memory_space<vmem>>, vector<1x128x128xbf16>
    %12 = vector.shape_cast %11 : vector<1x128x128xbf16> to vector<128x128xbf16>
    %c1_11 = arith.constant 1 : index
    %c0_12 = arith.constant 0 : index
    %13 = vector.load %arg4[%c1_11, %c0_12] : memref<5x128xf32, #tpu.memory_space<vmem>>, vector<1x128xf32>
    %c2 = arith.constant 2 : index
    %c0_13 = arith.constant 0 : index
    %14 = vector.load %arg4[%c2, %c0_13] : memref<5x128xf32, #tpu.memory_space<vmem>>, vector<1x128xf32>
    %15 = arith.truncf %8 : vector<8x128xf32> to vector<8x128xbf16>
    %cst_14 = arith.constant dense<0.000000e+00> : vector<8x128xf32>
    %16 = tpu.matmul %15, %10, %cst_14 {dimension_numbers = #tpu.dot_dimension_numbers<[1], [0], [0], [1], [0, 0, 1, 1], [], []>} : vector<8x128xbf16>, vector<128x128xbf16>, vector<8x128xf32> -> vector<8x128xf32>
    %17 = vector.broadcast %13 : vector<1x128xf32> to vector<8x128xf32>
    %18 = arith.addf %16, %17 : vector<8x128xf32>
    %cst_15 = arith.constant 0.000000e+00 : f32
    %19 = vector.broadcast %cst_15 : f32 to vector<8x128xf32>
    %20 = arith.maximumf %18, %19 : vector<8x128xf32>
    %21 = arith.truncf %20 : vector<8x128xf32> to vector<8x128xbf16>
    %cst_16 = arith.constant dense<0.000000e+00> : vector<8x128xf32>
    %22 = tpu.matmul %21, %12, %cst_16 {dimension_numbers = #tpu.dot_dimension_numbers<[1], [0], [0], [1], [0, 0, 1, 1], [], []>} : vector<8x128xbf16>, vector<128x128xbf16>, vector<8x128xf32> -> vector<8x128xf32>
    %23 = vector.broadcast %14 : vector<1x128xf32> to vector<8x128xf32>
    %24 = arith.addf %22, %23 : vector<8x128xf32>
    %25 = arith.addf %24, %8 : vector<8x128xf32>
    %cst_17 = arith.constant 0.000000e+00 : f32
    %26 = vector.broadcast %cst_17 : f32 to vector<8x128xf32>
    %27 = arith.maximumf %25, %26 : vector<8x128xf32>
    %c2_18 = arith.constant 2 : index
    %c0_19 = arith.constant 0 : index
    %c0_20 = arith.constant 0 : index
    %28 = vector.load %arg3[%c2_18, %c0_19, %c0_20] : memref<4x128x128xbf16, #tpu.memory_space<vmem>>, vector<1x128x128xbf16>
    %29 = vector.shape_cast %28 : vector<1x128x128xbf16> to vector<128x128xbf16>
    %c3 = arith.constant 3 : index
    %c0_21 = arith.constant 0 : index
    %c0_22 = arith.constant 0 : index
    %30 = vector.load %arg3[%c3, %c0_21, %c0_22] : memref<4x128x128xbf16, #tpu.memory_space<vmem>>, vector<1x128x128xbf16>
    %31 = vector.shape_cast %30 : vector<1x128x128xbf16> to vector<128x128xbf16>
    %c3_23 = arith.constant 3 : index
    %c0_24 = arith.constant 0 : index
    %32 = vector.load %arg4[%c3_23, %c0_24] : memref<5x128xf32, #tpu.memory_space<vmem>>, vector<1x128xf32>
    %c4 = arith.constant 4 : index
    %c0_25 = arith.constant 0 : index
    %33 = vector.load %arg4[%c4, %c0_25] : memref<5x128xf32, #tpu.memory_space<vmem>>, vector<1x128xf32>
    %34 = arith.truncf %27 : vector<8x128xf32> to vector<8x128xbf16>
    %cst_26 = arith.constant dense<0.000000e+00> : vector<8x128xf32>
    %35 = tpu.matmul %34, %29, %cst_26 {dimension_numbers = #tpu.dot_dimension_numbers<[1], [0], [0], [1], [0, 0, 1, 1], [], []>} : vector<8x128xbf16>, vector<128x128xbf16>, vector<8x128xf32> -> vector<8x128xf32>
    %36 = vector.broadcast %32 : vector<1x128xf32> to vector<8x128xf32>
    %37 = arith.addf %35, %36 : vector<8x128xf32>
    %cst_27 = arith.constant 0.000000e+00 : f32
    %38 = vector.broadcast %cst_27 : f32 to vector<8x128xf32>
    %39 = arith.maximumf %37, %38 : vector<8x128xf32>
    %40 = arith.truncf %39 : vector<8x128xf32> to vector<8x128xbf16>
    %cst_28 = arith.constant dense<0.000000e+00> : vector<8x128xf32>
    %41 = tpu.matmul %40, %31, %cst_28 {dimension_numbers = #tpu.dot_dimension_numbers<[1], [0], [0], [1], [0, 0, 1, 1], [], []>} : vector<8x128xbf16>, vector<128x128xbf16>, vector<8x128xf32> -> vector<8x128xf32>
    %42 = vector.broadcast %33 : vector<1x128xf32> to vector<8x128xf32>
    %43 = arith.addf %41, %42 : vector<8x128xf32>
    %44 = arith.addf %43, %27 : vector<8x128xf32>
    %cst_29 = arith.constant 0.000000e+00 : f32
    %45 = vector.broadcast %cst_29 : f32 to vector<8x128xf32>
    %46 = arith.maximumf %44, %45 : vector<8x128xf32>
    %47 = arith.truncf %46 : vector<8x128xf32> to vector<8x128xbf16>
    %c0_30 = arith.constant 0 : index
    %c0_31 = arith.constant 0 : index
    %48 = vector.load %arg5[%c0_30, %c0_31] : memref<8x128xbf16, #tpu.memory_space<vmem>>, vector<8x128xbf16>
    tpu.vector_store %arg5[%c0_30, %c0_31], %47 {strides = array<i32>} : memref<8x128xbf16, #tpu.memory_space<vmem>>, vector<8x128xbf16>,
    return
  }
  func.func @transform_0(%arg0: i32) -> (i32, i32) {
    %c0_i32 = arith.constant 0 : i32
    %c0_i32_0 = arith.constant 0 : i32
    return %arg0, %c0_i32 : i32, i32
  }
  func.func @transform_1(%arg0: i32) -> (i32, i32) {
    %c0_i32 = arith.constant 0 : i32
    %c0_i32_0 = arith.constant 0 : i32
    %c0_i32_1 = arith.constant 0 : i32
    return %c0_i32, %c0_i32_0 : i32, i32
  }
  func.func @transform_2(%arg0: i32) -> (i32, i32, i32) {
    %c0_i32 = arith.constant 0 : i32
    %c0_i32_0 = arith.constant 0 : i32
    %c0_i32_1 = arith.constant 0 : i32
    %c0_i32_2 = arith.constant 0 : i32
    return %c0_i32, %c0_i32_0, %c0_i32_1 : i32, i32, i32
  }
  func.func @transform_3(%arg0: i32) -> (i32, i32) {
    %c0_i32 = arith.constant 0 : i32
    %c0_i32_0 = arith.constant 0 : i32
    %c0_i32_1 = arith.constant 0 : i32
    return %c0_i32, %c0_i32_0 : i32, i32
  }
  func.func @transform_4(%arg0: i32) -> (i32, i32) {
    %c0_i32 = arith.constant 0 : i32
    %c0_i32_0 = arith.constant 0 : i32
    return %arg0, %c0_i32 : i32, i32
  }
}

</mosaic_0001>

<llo_original>
// kernel: tpu_custom_call.1
$region0: #{tpu_custom_call.1}
  #allocation0 [shape = 'u32[]', space=smem, size = 0x4, offset = 0x4, fixed_abs, tag = 'smem constant byte address 0x4 - core index']
  #allocation1 [shape = 'u32[144,128]{1,0:T(1,128)}', space=vmem, size = 0x12000, scoped, tag = 'internal scratch']
  %s0 = inlined_call_operand.vmem [shape: f32[40,16], index: 0, kind: input, shape index: {}]
  %s1 = inlined_call_operand.vmem [shape: bf16[16,128], index: 1, kind: input, shape index: {}]
  %s2 = inlined_call_operand.hbm [shape: bf16[4,128,128], index: 2, kind: input, shape index: {}]
  %s3 = inlined_call_operand.vmem [shape: f32[5,128], index: 3, kind: input, shape index: {}]
  %s4 = inlined_call_operand.hbm [shape: bf16[40,128], index: 4, kind: output, shape index: {}]
  %s5 = sld [smem:[#allocation0]]
  $region53: #{tpu_custom_call.1} parent=0
    _
  %s7 = ssub.s32 1, %s5
  %s8 = scalar_select 0, %s7, %s5
  $region1: #{tpu_custom_call.1} parent=0
    #allocation2 [shape = 'u8[131072]{0}', space=vmem, size = 0x20000, scoped, tag = 'input window, operand 2, single buffered']
    #allocation3 [shape = 's32[2]{0}', space=sflag, size = 0x8, scoped, tag = 'scoped memory for tpu_custom_call.1']
    #allocation4 [shape = 's32[2]{0}', space=sflag, size = 0x8, scoped, tag = 'scoped memory for tpu_custom_call.1']
    #allocation5 [shape = 'u8[4096]{0}', space=vmem, size = 0x1000, scoped, tag = 'output window, operand 0']
    %9 = vsyncpa [#allocation3], 0
    %10 = vsyncpa [#allocation4], 0
    %s11 = scalar_lea.sflag [#allocation4], 1
    %12 = vsyncpa %s11, 0
    loop: start=0, step=1, limit=7
    $region2: #{tpu_custom_call.1} parent=1 // loop_pre_header
      _
    $region3: #{tpu_custom_call.1} parent=1 // loop_header
      %s14 = sphi 0, %s18
      %p15 = scmp.ge.s32.totalorder %s14, 7
      %s24 = sphi 0, %s26
      %s27 = sphi 0, %s24
      %s28 = sphi 0, %s27
      %s44 = sphi 0, %s28
      %s48 = sphi 0, %s48
      %s50 = sphi 0, %s48
      %s51 = sphi 0, %s50
      %s65 = sphi 0, %s51
      %s69 = sphi 0, %s69
      %s71 = sphi 0, %s69
      %s72 = sphi 0, %s71
      %s86 = sphi 0, %s72
      %s90 = sphi 0, %s90
      %s92 = sphi 0, %s90
      %s93 = sphi 0, %s92
      %s107 = sphi 0, %s93
      %s113 = sphi 0, %s115
      %s116 = sphi 0, %s113
      %s117 = sphi 0, %s116
      %s133 = sphi 0, %s117
    $region4: #{tpu_custom_call.1} parent=1 // loop_header_branch
      %17 = sbr.rel (%p15) target = $region8
    $region5: #{tpu_custom_call.1} parent=1 // loop_body
      %s19 = ssub.s32 %s14, 1
      %s20 = ssub.s32 %s14, 2
      %s21 = sadd.s32 %s14, 1
      %s22 = ssub.s32 %s14, %s21
      %p23 = scmp.eq.s32.totalorder %s22, 0
      %s25 = sadd.s32 %s24, 1
      %s26 = scalar_select %p23, %s24, %s25
      %p29 = pneg %p23
      %p30 = scmp.eq.s32.totalorder %s14, 4
      %p31 = por %p29, %p30
      %p32 = scmp.ne.s32.totalorder %s24, %s27
      %p33 = scmp.eq.s32.totalorder %s14, 0
      %p34 = por %p32, %p33
      %p35 = scmp.ne.s32.totalorder %s24, %s27
      %p36 = scmp.eq.s32.totalorder %s19, 4
      %p37 = por %p35, %p36
      %p38 = scmp.ne.s32.totalorder %s27, %s28
      %p39 = scmp.eq.s32.totalorder %s19, 0
      %p40 = por %p38, %p39
      %p41 = scmp.ne.s32.totalorder %s27, %s28
      %p42 = scmp.eq.s32.totalorder %s20, 4
      %p43 = por %p41, %p42
      %p45 = scmp.ne.s32.totalorder %s28, %s44
      %p46 = scmp.eq.s32.totalorder %s20, 0
      %p47 = por %p45, %p46
      %s49 = sadd.s32 %s48, 1
      %p52 = scmp.eq.s32.totalorder %s14, 4
      %p53 = scmp.ne.s32.totalorder %s48, %s50
      %p54 = scmp.eq.s32.totalorder %s14, 0
      %p55 = por %p53, %p54
      %p56 = scmp.ne.s32.totalorder %s48, %s50
      %p57 = scmp.eq.s32.totalorder %s19, 4
      %p58 = por %p56, %p57
      %p59 = scmp.ne.s32.totalorder %s50, %s51
      %p60 = scmp.eq.s32.totalorder %s19, 0
      %p61 = por %p59, %p60
      %p62 = scmp.ne.s32.totalorder %s50, %s51
      %p63 = scmp.eq.s32.totalorder %s20, 4
      %p64 = por %p62, %p63
      %p66 = scmp.ne.s32.totalorder %s51, %s65
      %p67 = scmp.eq.s32.totalorder %s20, 0
      %p68 = por %p66, %p67
      %s70 = sadd.s32 %s69, 1
      %p73 = scmp.eq.s32.totalorder %s14, 4
      %p74 = scmp.ne.s32.totalorder %s69, %s71
      %p75 = scmp.eq.s32.totalorder %s14, 0
      %p76 = por %p74, %p75
      %p77 = scmp.ne.s32.totalorder %s69, %s71
      %p78 = scmp.eq.s32.totalorder %s19, 4
      %p79 = por %p77, %p78
      %p80 = scmp.ne.s32.totalorder %s71, %s72
      %p81 = scmp.eq.s32.totalorder %s19, 0
      %p82 = por %p80, %p81
      %p83 = scmp.ne.s32.totalorder %s71, %s72
      %p84 = scmp.eq.s32.totalorder %s20, 4
      %p85 = por %p83, %p84
      %p87 = scmp.ne.s32.totalorder %s72, %s86
      %p88 = scmp.eq.s32.totalorder %s20, 0
      %p89 = por %p87, %p88
      %s91 = sadd.s32 %s90, 1
      %p94 = scmp.eq.s32.totalorder %s14, 4
      %p95 = scmp.ne.s32.totalorder %s90, %s92
      %p96 = scmp.eq.s32.totalorder %s14, 0
      %p97 = por %p95, %p96
      %p98 = scmp.ne.s32.totalorder %s90, %s92
      %p99 = scmp.eq.s32.totalorder %s19, 4
      %p100 = por %p98, %p99
      %p101 = scmp.ne.s32.totalorder %s92, %s93
      %p102 = scmp.eq.s32.totalorder %s19, 0
      %p103 = por %p101, %p102
      %p104 = scmp.ne.s32.totalorder %s92, %s93
      %p105 = scmp.eq.s32.totalorder %s20, 4
      %p106 = por %p104, %p105
      %p108 = scmp.ne.s32.totalorder %s93, %s107
      %p109 = scmp.eq.s32.totalorder %s20, 0
      %p110 = por %p108, %p109
      %s111 = ssub.s32 %s14, %s21
      %p112 = scmp.eq.s32.totalorder %s111, 0
      %s114 = sadd.s32 %s113, 1
      %s115 = scalar_select %p112, %s113, %s114
      %p118 = pneg %p112
      %p119 = scmp.eq.s32.totalorder %s14, 4
      %p120 = por %p118, %p119
      %p121 = scmp.ne.s32.totalorder %s113, %s116
      %p122 = scmp.eq.s32.totalorder %s14, 0
      %p123 = por %p121, %p122
      %p124 = scmp.ne.s32.totalorder %s113, %s116
      %p125 = scmp.eq.s32.totalorder %s19, 4
      %p126 = por %p124, %p125
      %p127 = scmp.ne.s32.totalorder %s116, %s117
      %p128 = scmp.eq.s32.totalorder %s19, 0
      %p129 = por %p127, %p128
      %p130 = scmp.ne.s32.totalorder %s116, %s117
      %p131 = scmp.eq.s32.totalorder %s20, 4
      %p132 = por %p130, %p131
      %p134 = scmp.ne.s32.totalorder %s117, %s133
      %p135 = scmp.eq.s32.totalorder %s20, 0
      %p136 = por %p134, %p135
      %p137 = scmp.le.s32.totalorder 1, %s14
      %p138 = scmp.lt.s32.totalorder %s14, 6
      %p139 = pnand %p137, %p138
      %p140 = pneg %p139
      // Predicated region
      $region9: #{tpu_custom_call.1} parent=5 // pred_check
        _
      $region10: #{tpu_custom_call.1} parent=5 // pred_check_branch
        %142 = sbr.rel (%p139) target = $region12
      $region11: #{tpu_custom_call.1} parent=5 // pred_region
        %s143 = ssub.s32 %s14, 1
        // Predicated region
        $region13: #{tpu_custom_call.1} parent=11 // pred_check
          %p144 = pneg %p61
        $region14: #{tpu_custom_call.1} parent=11 // pred_check_branch
          %146 = sbr.rel (%p144) target = $region16
        $region15: #{tpu_custom_call.1} parent=11 // pred_region
          _
        $region16: #{tpu_custom_call.1} parent=11 // pred_fallthru
          _
        // Predicated region
        $region17: #{tpu_custom_call.1} parent=11 // pred_check
          %p147 = pneg %p82
        $region18: #{tpu_custom_call.1} parent=11 // pred_check_branch
          %149 = sbr.rel (%p147) target = $region20
        $region19: #{tpu_custom_call.1} parent=11 // pred_region
          %s151 = ssub.s32 4096, 4096
          %152 = vsyncadd [#allocation3], %s151
          %s153 = sshll.u32 [#allocation2], 4
          %s154 = int_to_ptr.vmem [resolvable:$true] %s153
          %159 = dma.hbm_to_vmem [thread:$0]  %s2, 4096, %s154, [#allocation3], 64, 64, 4
        $region20: #{tpu_custom_call.1} parent=11 // pred_fallthru
          _
        // Predicated region
        $region21: #{tpu_custom_call.1} parent=11 // pred_check
          %p160 = pneg %p103
        $region22: #{tpu_custom_call.1} parent=11 // pred_check_branch
          %162 = sbr.rel (%p160) target = $region24
        $region23: #{tpu_custom_call.1} parent=11 // pred_region
          _
        $region24: #{tpu_custom_call.1} parent=11 // pred_fallthru
          _
      $region12: #{tpu_custom_call.1} parent=5 // pred_fallthru
        _
      %p163 = scmp.lt.s32.totalorder %s14, 5
      // Predicated region
      $region25: #{tpu_custom_call.1} parent=5 // pred_check
        %p164 = pneg %p163
      $region26: #{tpu_custom_call.1} parent=5 // pred_check_branch
        %166 = sbr.rel (%p164) target = $region28
      $region27: #{tpu_custom_call.1} parent=5 // pred_region
        // Predicated region
        $region29: #{tpu_custom_call.1} parent=27 // pred_check
          %p167 = pneg %p34
        $region30: #{tpu_custom_call.1} parent=27 // pred_check_branch
          %169 = sbr.rel (%p167) target = $region32
        $region31: #{tpu_custom_call.1} parent=27 // pred_region
          %p170 = scmp.lt.s32.totalorder %s14, 4
          %s171 = scalar_select %p170, %s14, 4
          %s172 = smul.addr %s171, 8
          %s173 = scalar_lea.vmem %s0, %s172
        $region32: #{tpu_custom_call.1} parent=27 // pred_fallthru
          _
      $region28: #{tpu_custom_call.1} parent=5 // pred_fallthru
        _
      %p174 = scmp.le.s32.totalorder 1, %s14
      %p175 = scmp.lt.s32.totalorder %s14, 6
      %p176 = pnand %p174, %p175
      %p177 = pneg %p176
      // Predicated region
      $region33: #{tpu_custom_call.1} parent=5 // pred_check
        _
      $region34: #{tpu_custom_call.1} parent=5 // pred_check_branch
        %179 = sbr.rel (%p176) target = $region36
      $region35: #{tpu_custom_call.1} parent=5 // pred_region
        %s180 = ssub.s32 %s14, 1
        // Predicated region
        $region37: #{tpu_custom_call.1} parent=35 // pred_check
          %p181 = pneg %p82
        $region38: #{tpu_custom_call.1} parent=35 // pred_check_branch
          %183 = sbr.rel (%p181) target = $region40
        $region39: #{tpu_custom_call.1} parent=35 // pred_region
          %184 = dma.done [#allocation3], 4096
        $region40: #{tpu_custom_call.1} parent=35 // pred_fallthru
          _
        %p185 = scmp.lt.s32.totalorder %s19, 4
        %s186 = scalar_select %p185, %s19, 4
        %s187 = smul.addr %s186, 8
        %s188 = scalar_lea.vmem %s0, %s187
        %p189 = pneg %p40
        %p190 = pneg %p37
        %p191 = pneg %p61
        %p192 = pneg %p58
        %p193 = pneg %p82
        %p194 = pneg %p79
        %p195 = pneg %p103
        %p196 = pneg %p100
        %p197 = pneg %p129
        %p198 = pneg %p126
        %s199 = sand.u32 %s116, 1
        %s200 = scalar_lea.sflag [#allocation4], %s199
        %s201 = sand.u32 %s116, 1
        %s202 = smul.addr %s201, 4
        %s203 = scalar_lea.vmem [#allocation5], %s202
        %p204 = scmp.lt.s32.totalorder %s19, 4
        %s205 = scalar_select %p204, %s19, 4
        %s206 = smul.addr %s205, 8
        %s207 = scalar_lea.vmem %s0, %s206
        %v209 = vld [vmem:[%s207] sm:$0xff]
        %v210 = vpack.c.bf16 %v209, %v209
        %v211 = vld [vmem:[%s1] sm:$0xf]
        %v212 = vld [vmem:[%s1 + $0x4] sm:$0xf]
        %v213 = vld [vmem:[%s3] sm:$0x1]
        %v214 = vlaneseq
        %v215 = vshrl.u32 %v214, 7
        %v216 = vsub.s32 0, %v215
        %v217 = vrot.slane %v213, %v216
        %v220 = vunpack.c.l.b16 %v211
        %v221 = vunpack.c.l.b16 %v212
        %v222 = vpack.c.b16 %v221, %v220
        %vm224 = vcmask 130048
        %v226 = vsel %vm224, %v210, 0
        %228 = vmatprep.subr.bf16.mxu0 0
        %229 = vmatpush1.bf16.msra.mxu0 %v222
        %230 = vmatprep.subr.bf16.mxu0 0
        %231 = vmatpush1.bf16.msra.mxu0 0
        %232 = vmatprep.subr.bf16.mxu0 0
        %233 = vmatpush1.bf16.msra.mxu0 0
        %234 = vmatprep.subr.bf16.mxu0 0
        %235 = vmatpush1.bf16.msra.mxu0 0
        %236 = vmatprep.subr.bf16.mxu0 0
        %237 = vmatpush1.bf16.msra.mxu0 0
        %238 = vmatprep.subr.bf16.mxu0 0
        %239 = vmatpush1.bf16.msra.mxu0 0
        %240 = vmatprep.subr.bf16.mxu0 0
        %241 = vmatpush1.bf16.msra.mxu0 0
        %242 = vmatprep.subr.bf16.mxu0 0
        %243 = vmatpush1.bf16.msra.mxu0 0
        %244 = vmatprep.subr.bf16.mxu0 0
        %245 = vmatpush1.bf16.msra.mxu0 0
        %246 = vmatprep.subr.bf16.mxu0 0
        %247 = vmatpush1.bf16.msra.mxu0 0
        %248 = vmatprep.subr.bf16.mxu0 0
        %249 = vmatpush1.bf16.msra.mxu0 0
        %250 = vmatprep.subr.bf16.mxu0 0
        %251 = vmatpush1.bf16.msra.mxu0 0
        %252 = vmatprep.subr.bf16.mxu0 0
        %253 = vmatpush1.bf16.msra.mxu0 0
        %254 = vmatprep.subr.bf16.mxu0 0
        %255 = vmatpush1.bf16.msra.mxu0 0
        %256 = vmatprep.subr.bf16.mxu0 0
        %257 = vmatpush1.bf16.msra.mxu0 0
        %258 = vmatprep.subr.bf16.mxu0 0
        %259 = vmatpush1.bf16.msra.mxu0 0
        %260 = vmatprep.mubr.bf16.mxu0 0
        %261 = vmatmul.mubr.bf16.gmra.mrb[0].mxu0 %v226
        %v262 = vpop.f32.mrb[0].mxu0
        %v263 = vadd.f32 %v217, %v262
        %v264 = vpop.f32.mrb[0].mxu0
        %v265 = vpop.f32.mrb[0].mxu0
        %v266 = vpop.f32.mrb[0].mxu0
        %267 = vdwg.mxu0
        %v268 = vmax.f32 %v263, 0.0
        %v269 = vld [vmem:[#allocation2] sm:$0xf]
        %v270 = vld [vmem:[#allocation2 + $0x4] sm:$0xf]
        %v271 = vld [vmem:[#allocation2 + $0x8] sm:$0xf]
        %v272 = vld [vmem:[#allocation2 + $0xc] sm:$0xf]
        %v273 = vld [vmem:[#allocation2 + $0x10] sm:$0xf]
        %v274 = vld [vmem:[#allocation2 + $0x14] sm:$0xf]
        %v275 = vld [vmem:[#allocation2 + $0x18] sm:$0xf]
        %v276 = vld [vmem:[#allocation2 + $0x1c] sm:$0xf]
        %v277 = vld [vmem:[#allocation2 + $0x20] sm:$0xf]
        %v278 = vld [vmem:[#allocation2 + $0x24] sm:$0xf]
        %v279 = vld [vmem:[#allocation2 + $0x28] sm:$0xf]
        %v280 = vld [vmem:[#allocation2 + $0x2c] sm:$0xf]
        %v281 = vld [vmem:[#allocation2 + $0x30] sm:$0xf]
        %v282 = vld [vmem:[#allocation2 + $0x34] sm:$0xf]
        %v283 = vld [vmem:[#allocation2 + $0x38] sm:$0xf]
        %v284 = vld [vmem:[#allocation2 + $0x3c] sm:$0xf]
        %s285 = scalar_lea.vmem [#allocation2], 64
        %v286 = vld [vmem:[%s285] sm:$0xf]
        %v287 = vld [vmem:[%s285 + $0x4] sm:$0xf]
        %v288 = vld [vmem:[%s285 + $0x8] sm:$0xf]
        %v289 = vld [vmem:[%s285 + $0xc] sm:$0xf]
        %v290 = vld [vmem:[%s285 + $0x10] sm:$0xf]
        %v291 = vld [vmem:[%s285 + $0x14] sm:$0xf]
        %v292 = vld [vmem:[%s285 + $0x18] sm:$0xf]
        %v293 = vld [vmem:[%s285 + $0x1c] sm:$0xf]
        %v294 = vld [vmem:[%s285 + $0x20] sm:$0xf]
        %v295 = vld [vmem:[%s285 + $0x24] sm:$0xf]
        %v296 = vld [vmem:[%s285 + $0x28] sm:$0xf]
        %v297 = vld [vmem:[%s285 + $0x2c] sm:$0xf]
        %v298 = vld [vmem:[%s285 + $0x30] sm:$0xf]
        %v299 = vld [vmem:[%s285 + $0x34] sm:$0xf]
        %v300 = vld [vmem:[%s285 + $0x38] sm:$0xf]
        %v301 = vld [vmem:[%s285 + $0x3c] sm:$0xf]
        %v302 = vld [vmem:[%s3 + $0x1] sm:$0x1]
        %v303 = vld [vmem:[%s3 + $0x2] sm:$0x1]
        %v304 = vpack.c.bf16 %v268, %v268
        %v305 = vlaneseq
        %v306 = vshrl.u32 %v305, 7
        %v307 = vsub.s32 0, %v306
        %v308 = vrot.slane %v302, %v307
        %v325 = vunpack.c.l.b16 %v269
        %v326 = vunpack.c.l.b16 %v270
        %v327 = vunpack.c.l.b16 %v271
        %v328 = vunpack.c.l.b16 %v272
        %v329 = vunpack.c.l.b16 %v273
        %v330 = vunpack.c.l.b16 %v274
        %v331 = vunpack.c.l.b16 %v275
        %v332 = vunpack.c.l.b16 %v276
        %v333 = vunpack.c.l.b16 %v277
        %v334 = vunpack.c.l.b16 %v278
        %v335 = vunpack.c.l.b16 %v279
        %v336 = vunpack.c.l.b16 %v280
        %v337 = vunpack.c.l.b16 %v281
        %v338 = vunpack.c.l.b16 %v282
        %v339 = vunpack.c.l.b16 %v283
        %v340 = vunpack.c.l.b16 %v284
        %v341 = vpack.c.b16 %v326, %v325
        %v342 = vpack.c.b16 %v328, %v327
        %v343 = vpack.c.b16 %v330, %v329
        %v344 = vpack.c.b16 %v332, %v331
        %v345 = vpack.c.b16 %v334, %v333
        %v346 = vpack.c.b16 %v336, %v335
        %v347 = vpack.c.b16 %v338, %v337
        %v348 = vpack.c.b16 %v340, %v339
        %357 = vmatprep.subr.bf16.mxu0 0
        %358 = vmatpush1.bf16.msra.mxu0 %v341
        %359 = vmatprep.subr.bf16.mxu0 0
        %360 = vmatpush1.bf16.msra.mxu0 %v342
        %361 = vmatprep.subr.bf16.mxu0 0
        %362 = vmatpush1.bf16.msra.mxu0 %v343
        %363 = vmatprep.subr.bf16.mxu0 0
        %364 = vmatpush1.bf16.msra.mxu0 %v344
        %365 = vmatprep.subr.bf16.mxu0 0
        %366 = vmatpush1.bf16.msra.mxu0 %v345
        %367 = vmatprep.subr.bf16.mxu0 0
        %368 = vmatpush1.bf16.msra.mxu0 %v346
        %369 = vmatprep.subr.bf16.mxu0 0
        %370 = vmatpush1.bf16.msra.mxu0 %v347
        %371 = vmatprep.subr.bf16.mxu0 0
        %372 = vmatpush1.bf16.msra.mxu0 %v348
        %373 = vmatprep.subr.bf16.mxu0 0
        %374 = vmatpush1.bf16.msra.mxu0 0
        %375 = vmatprep.subr.bf16.mxu0 0
        %376 = vmatpush1.bf16.msra.mxu0 0
        %377 = vmatprep.subr.bf16.mxu0 0
        %378 = vmatpush1.bf16.msra.mxu0 0
        %379 = vmatprep.subr.bf16.mxu0 0
        %380 = vmatpush1.bf16.msra.mxu0 0
        %381 = vmatprep.subr.bf16.mxu0 0
        %382 = vmatpush1.bf16.msra.mxu0 0
        %383 = vmatprep.subr.bf16.mxu0 0
        %384 = vmatpush1.bf16.msra.mxu0 0
        %385 = vmatprep.subr.bf16.mxu0 0
        %386 = vmatpush1.bf16.msra.mxu0 0
        %387 = vmatprep.subr.bf16.mxu0 0
        %388 = vmatpush1.bf16.msra.mxu0 0
        %389 = vmatprep.mubr.bf16.mxu0 0
        %390 = vmatmul.mubr.bf16.gmra.mrb[0].mxu0 %v304
        %v391 = vpop.f32.mrb[0].mxu0
        %v392 = vadd.f32 %v308, %v391
        %v393 = vpop.f32.mrb[0].mxu0
        %v394 = vpop.f32.mrb[0].mxu0
        %v395 = vpop.f32.mrb[0].mxu0
        %396 = vdwg.mxu0
        %v397 = vmax.f32 %v392, 0.0
        %v398 = vpack.c.bf16 %v397, %v397
        %v399 = vlaneseq
        %v400 = vshrl.u32 %v399, 7
        %v401 = vsub.s32 0, %v400
        %v402 = vrot.slane %v303, %v401
        %v419 = vunpack.c.l.b16 %v286
        %v420 = vunpack.c.l.b16 %v287
        %v421 = vunpack.c.l.b16 %v288
        %v422 = vunpack.c.l.b16 %v289
        %v423 = vunpack.c.l.b16 %v290
        %v424 = vunpack.c.l.b16 %v291
        %v425 = vunpack.c.l.b16 %v292
        %v426 = vunpack.c.l.b16 %v293
        %v427 = vunpack.c.l.b16 %v294
        %v428 = vunpack.c.l.b16 %v295
        %v429 = vunpack.c.l.b16 %v296
        %v430 = vunpack.c.l.b16 %v297
        %v431 = vunpack.c.l.b16 %v298
        %v432 = vunpack.c.l.b16 %v299
        %v433 = vunpack.c.l.b16 %v300
        %v434 = vunpack.c.l.b16 %v301
        %v435 = vpack.c.b16 %v420, %v419
        %v436 = vpack.c.b16 %v422, %v421
        %v437 = vpack.c.b16 %v424, %v423
        %v438 = vpack.c.b16 %v426, %v425
        %v439 = vpack.c.b16 %v428, %v427
        %v440 = vpack.c.b16 %v430, %v429
        %v441 = vpack.c.b16 %v432, %v431
        %v442 = vpack.c.b16 %v434, %v433
        %451 = vmatprep.subr.bf16.mxu0 0
        %452 = vmatpush1.bf16.msra.mxu0 %v435
        %453 = vmatprep.subr.bf16.mxu0 0
        %454 = vmatpush1.bf16.msra.mxu0 %v436
        %455 = vmatprep.subr.bf16.mxu0 0
        %456 = vmatpush1.bf16.msra.mxu0 %v437
        %457 = vmatprep.subr.bf16.mxu0 0
        %458 = vmatpush1.bf16.msra.mxu0 %v438
        %459 = vmatprep.subr.bf16.mxu0 0
        %460 = vmatpush1.bf16.msra.mxu0 %v439
        %461 = vmatprep.subr.bf16.mxu0 0
        %462 = vmatpush1.bf16.msra.mxu0 %v440
        %463 = vmatprep.subr.bf16.mxu0 0
        %464 = vmatpush1.bf16.msra.mxu0 %v441
        %465 = vmatprep.subr.bf16.mxu0 0
        %466 = vmatpush1.bf16.msra.mxu0 %v442
        %467 = vmatprep.subr.bf16.mxu0 0
        %468 = vmatpush1.bf16.msra.mxu0 0
        %469 = vmatprep.subr.bf16.mxu0 0
        %470 = vmatpush1.bf16.msra.mxu0 0
        %471 = vmatprep.subr.bf16.mxu0 0
        %472 = vmatpush1.bf16.msra.mxu0 0
        %473 = vmatprep.subr.bf16.mxu0 0
        %474 = vmatpush1.bf16.msra.mxu0 0
        %475 = vmatprep.subr.bf16.mxu0 0
        %476 = vmatpush1.bf16.msra.mxu0 0
        %477 = vmatprep.subr.bf16.mxu0 0
        %478 = vmatpush1.bf16.msra.mxu0 0
        %479 = vmatprep.subr.bf16.mxu0 0
        %480 = vmatpush1.bf16.msra.mxu0 0
        %481 = vmatprep.subr.bf16.mxu0 0
        %482 = vmatpush1.bf16.msra.mxu0 0
        %483 = vmatprep.mubr.bf16.mxu0 0
        %484 = vmatmul.mubr.bf16.gmra.mrb[0].mxu0 %v398
        %v485 = vpop.f32.mrb[0].mxu0
        %v486 = vadd.f32 %v402, %v485
        %v487 = vpop.f32.mrb[0].mxu0
        %v488 = vpop.f32.mrb[0].mxu0
        %v489 = vpop.f32.mrb[0].mxu0
        %490 = vdwg.mxu0
        %v491 = vadd.f32 %v486, %v268
        %v492 = vmax.f32 %v491, 0.0
        %s493 = scalar_lea.vmem [#allocation2], 128
        %v494 = vld [vmem:[%s493] sm:$0xf]
        %v495 = vld [vmem:[%s493 + $0x4] sm:$0xf]
        %v496 = vld [vmem:[%s493 + $0x8] sm:$0xf]
        %v497 = vld [vmem:[%s493 + $0xc] sm:$0xf]
        %v498 = vld [vmem:[%s493 + $0x10] sm:$0xf]
        %v499 = vld [vmem:[%s493 + $0x14] sm:$0xf]
        %v500 = vld [vmem:[%s493 + $0x18] sm:$0xf]
        %v501 = vld [vmem:[%s493 + $0x1c] sm:$0xf]
        %v502 = vld [vmem:[%s493 + $0x20] sm:$0xf]
        %v503 = vld [vmem:[%s493 + $0x24] sm:$0xf]
        %v504 = vld [vmem:[%s493 + $0x28] sm:$0xf]
        %v505 = vld [vmem:[%s493 + $0x2c] sm:$0xf]
        %v506 = vld [vmem:[%s493 + $0x30] sm:$0xf]
        %v507 = vld [vmem:[%s493 + $0x34] sm:$0xf]
        %v508 = vld [vmem:[%s493 + $0x38] sm:$0xf]
        %v509 = vld [vmem:[%s493 + $0x3c] sm:$0xf]
        %s510 = scalar_lea.vmem [#allocation2], 192
        %v511 = vld [vmem:[%s510] sm:$0xf]
        %v512 = vld [vmem:[%s510 + $0x4] sm:$0xf]
        %v513 = vld [vmem:[%s510 + $0x8] sm:$0xf]
        %v514 = vld [vmem:[%s510 + $0xc] sm:$0xf]
        %v515 = vld [vmem:[%s510 + $0x10] sm:$0xf]
        %v516 = vld [vmem:[%s510 + $0x14] sm:$0xf]
        %v517 = vld [vmem:[%s510 + $0x18] sm:$0xf]
        %v518 = vld [vmem:[%s510 + $0x1c] sm:$0xf]
        %v519 = vld [vmem:[%s510 + $0x20] sm:$0xf]
        %v520 = vld [vmem:[%s510 + $0x24] sm:$0xf]
        %v521 = vld [vmem:[%s510 + $0x28] sm:$0xf]
        %v522 = vld [vmem:[%s510 + $0x2c] sm:$0xf]
        %v523 = vld [vmem:[%s510 + $0x30] sm:$0xf]
        %v524 = vld [vmem:[%s510 + $0x34] sm:$0xf]
        %v525 = vld [vmem:[%s510 + $0x38] sm:$0xf]
        %v526 = vld [vmem:[%s510 + $0x3c] sm:$0xf]
        %v527 = vld [vmem:[%s3 + $0x3] sm:$0x1]
        %v528 = vld [vmem:[%s3 + $0x4] sm:$0x1]
        %v529 = vpack.c.bf16 %v492, %v492
        %v530 = vlaneseq
        %v531 = vshrl.u32 %v530, 7
        %v532 = vsub.s32 0, %v531
        %v533 = vrot.slane %v527, %v532
        %v550 = vunpack.c.l.b16 %v494
        %v551 = vunpack.c.l.b16 %v495
        %v552 = vunpack.c.l.b16 %v496
        %v553 = vunpack.c.l.b16 %v497
        %v554 = vunpack.c.l.b16 %v498
        %v555 = vunpack.c.l.b16 %v499
        %v556 = vunpack.c.l.b16 %v500
        %v557 = vunpack.c.l.b16 %v501
        %v558 = vunpack.c.l.b16 %v502
        %v559 = vunpack.c.l.b16 %v503
        %v560 = vunpack.c.l.b16 %v504
        %v561 = vunpack.c.l.b16 %v505
        %v562 = vunpack.c.l.b16 %v506
        %v563 = vunpack.c.l.b16 %v507
        %v564 = vunpack.c.l.b16 %v508
        %v565 = vunpack.c.l.b16 %v509
        %v566 = vpack.c.b16 %v551, %v550
        %v567 = vpack.c.b16 %v553, %v552
        %v568 = vpack.c.b16 %v555, %v554
        %v569 = vpack.c.b16 %v557, %v556
        %v570 = vpack.c.b16 %v559, %v558
        %v571 = vpack.c.b16 %v561, %v560
        %v572 = vpack.c.b16 %v563, %v562
        %v573 = vpack.c.b16 %v565, %v564
        %582 = vmatprep.subr.bf16.mxu0 0
        %583 = vmatpush1.bf16.msra.mxu0 %v566
        %584 = vmatprep.subr.bf16.mxu0 0
        %585 = vmatpush1.bf16.msra.mxu0 %v567
        %586 = vmatprep.subr.bf16.mxu0 0
        %587 = vmatpush1.bf16.msra.mxu0 %v568
        %588 = vmatprep.subr.bf16.mxu0 0
        %589 = vmatpush1.bf16.msra.mxu0 %v569
        %590 = vmatprep.subr.bf16.mxu0 0
        %591 = vmatpush1.bf16.msra.mxu0 %v570
        %592 = vmatprep.subr.bf16.mxu0 0
        %593 = vmatpush1.bf16.msra.mxu0 %v571
        %594 = vmatprep.subr.bf16.mxu0 0
        %595 = vmatpush1.bf16.msra.mxu0 %v572
        %596 = vmatprep.subr.bf16.mxu0 0
        %597 = vmatpush1.bf16.msra.mxu0 %v573
        %598 = vmatprep.subr.bf16.mxu0 0
        %599 = vmatpush1.bf16.msra.mxu0 0
        %600 = vmatprep.subr.bf16.mxu0 0
        %601 = vmatpush1.bf16.msra.mxu0 0
        %602 = vmatprep.subr.bf16.mxu0 0
        %603 = vmatpush1.bf16.msra.mxu0 0
        %604 = vmatprep.subr.bf16.mxu0 0
        %605 = vmatpush1.bf16.msra.mxu0 0
        %606 = vmatprep.subr.bf16.mxu0 0
        %607 = vmatpush1.bf16.msra.mxu0 0
        %608 = vmatprep.subr.bf16.mxu0 0
        %609 = vmatpush1.bf16.msra.mxu0 0
        %610 = vmatprep.subr.bf16.mxu0 0
        %611 = vmatpush1.bf16.msra.mxu0 0
        %612 = vmatprep.subr.bf16.mxu0 0
        %613 = vmatpush1.bf16.msra.mxu0 0
        %614 = vmatprep.mubr.bf16.mxu0 0
        %615 = vmatmul.mubr.bf16.gmra.mrb[0].mxu0 %v529
        %v616 = vpop.f32.mrb[0].mxu0
        %v617 = vadd.f32 %v533, %v616
        %v618 = vpop.f32.mrb[0].mxu0
        %v619 = vpop.f32.mrb[0].mxu0
        %v620 = vpop.f32.mrb[0].mxu0
        %621 = vdwg.mxu0
        %v622 = vmax.f32 %v617, 0.0
        %v623 = vpack.c.bf16 %v622, %v622
        %v624 = vlaneseq
        %v625 = vshrl.u32 %v624, 7
        %v626 = vsub.s32 0, %v625
        %v627 = vrot.slane %v528, %v626
        %v644 = vunpack.c.l.b16 %v511
        %v645 = vunpack.c.l.b16 %v512
        %v646 = vunpack.c.l.b16 %v513
        %v647 = vunpack.c.l.b16 %v514
        %v648 = vunpack.c.l.b16 %v515
        %v649 = vunpack.c.l.b16 %v516
        %v650 = vunpack.c.l.b16 %v517
        %v651 = vunpack.c.l.b16 %v518
        %v652 = vunpack.c.l.b16 %v519
        %v653 = vunpack.c.l.b16 %v520
        %v654 = vunpack.c.l.b16 %v521
        %v655 = vunpack.c.l.b16 %v522
        %v656 = vunpack.c.l.b16 %v523
        %v657 = vunpack.c.l.b16 %v524
        %v658 = vunpack.c.l.b16 %v525
        %v659 = vunpack.c.l.b16 %v526
        %v660 = vpack.c.b16 %v645, %v644
        %v661 = vpack.c.b16 %v647, %v646
        %v662 = vpack.c.b16 %v649, %v648
        %v663 = vpack.c.b16 %v651, %v650
        %v664 = vpack.c.b16 %v653, %v652
        %v665 = vpack.c.b16 %v655, %v654
        %v666 = vpack.c.b16 %v657, %v656
        %v667 = vpack.c.b16 %v659, %v658
        %676 = vmatprep.subr.bf16.mxu0 0
        %677 = vmatpush1.bf16.msra.mxu0 %v660
        %678 = vmatprep.subr.bf16.mxu0 0
        %679 = vmatpush1.bf16.msra.mxu0 %v661
        %680 = vmatprep.subr.bf16.mxu0 0
        %681 = vmatpush1.bf16.msra.mxu0 %v662
        %682 = vmatprep.subr.bf16.mxu0 0
        %683 = vmatpush1.bf16.msra.mxu0 %v663
        %684 = vmatprep.subr.bf16.mxu0 0
        %685 = vmatpush1.bf16.msra.mxu0 %v664
        %686 = vmatprep.subr.bf16.mxu0 0
        %687 = vmatpush1.bf16.msra.mxu0 %v665
        %688 = vmatprep.subr.bf16.mxu0 0
        %689 = vmatpush1.bf16.msra.mxu0 %v666
        %690 = vmatprep.subr.bf16.mxu0 0
        %691 = vmatpush1.bf16.msra.mxu0 %v667
        %692 = vmatprep.subr.bf16.mxu0 0
        %693 = vmatpush1.bf16.msra.mxu0 0
        %694 = vmatprep.subr.bf16.mxu0 0
        %695 = vmatpush1.bf16.msra.mxu0 0
        %696 = vmatprep.subr.bf16.mxu0 0
        %697 = vmatpush1.bf16.msra.mxu0 0
        %698 = vmatprep.subr.bf16.mxu0 0
        %699 = vmatpush1.bf16.msra.mxu0 0
        %700 = vmatprep.subr.bf16.mxu0 0
        %701 = vmatpush1.bf16.msra.mxu0 0
        %702 = vmatprep.subr.bf16.mxu0 0
        %703 = vmatpush1.bf16.msra.mxu0 0
        %704 = vmatprep.subr.bf16.mxu0 0
        %705 = vmatpush1.bf16.msra.mxu0 0
        %706 = vmatprep.subr.bf16.mxu0 0
        %707 = vmatpush1.bf16.msra.mxu0 0
        %708 = vmatprep.mubr.bf16.mxu0 0
        %709 = vmatmul.mubr.bf16.gmra.mrb[0].mxu0 %v623
        %v710 = vpop.f32.mrb[0].mxu0
        %v711 = vadd.f32 %v627, %v710
        %v712 = vpop.f32.mrb[0].mxu0
        %v713 = vpop.f32.mrb[0].mxu0
        %v714 = vpop.f32.mrb[0].mxu0
        %715 = vdwg.mxu0
        %v716 = vadd.f32 %v711, %v492
        %v717 = vmax.f32 %v716, 0.0
        %v718 = vpack.c.bf16 %v717, %v717
        %719 = vst [vmem:[%s203] sm:$0xf] %v718
        %s720 = sand.u32 %s116, 1
        %s721 = scalar_lea.sflag [#allocation4], %s720
        %s722 = sand.u32 %s116, 1
        %s723 = smul.addr %s722, 4
        %s724 = scalar_lea.vmem [#allocation5], %s723
        // Predicated region
        $region41: #{tpu_custom_call.1} parent=35 // pred_check
          %p725 = pneg %p126
        $region42: #{tpu_custom_call.1} parent=35 // pred_check_branch
          %727 = sbr.rel (%p725) target = $region44
        $region43: #{tpu_custom_call.1} parent=35 // pred_region
          %s729 = ssub.s32 64, 64
          %730 = vsyncadd %s721, %s729
          %s731 = smul.addr %s19, 64
          %s732 = scalar_lea.hbm %s4, %s731
          %s734 = sshll.u32 %s724, 4
          %s735 = int_to_ptr.vmem [resolvable:$true] %s734
          %737 = dma.vmem_to_hbm [thread:$0]  %s735, 64, %s732, %s721
        $region44: #{tpu_custom_call.1} parent=35 // pred_fallthru
          _
      $region36: #{tpu_custom_call.1} parent=5 // pred_fallthru
        _
      %p738 = scmp.le.s32.totalorder 2, %s14
      // Predicated region
      $region45: #{tpu_custom_call.1} parent=5 // pred_check
        %p739 = pneg %p738
      $region46: #{tpu_custom_call.1} parent=5 // pred_check_branch
        %741 = sbr.rel (%p739) target = $region48
      $region47: #{tpu_custom_call.1} parent=5 // pred_region
        %s742 = ssub.s32 %s14, 2
        // Predicated region
        $region49: #{tpu_custom_call.1} parent=47 // pred_check
          %p743 = pneg %p132
        $region50: #{tpu_custom_call.1} parent=47 // pred_check_branch
          %745 = sbr.rel (%p743) target = $region52
        $region51: #{tpu_custom_call.1} parent=47 // pred_region
          %s746 = sand.u32 %s117, 1
          %s747 = scalar_lea.sflag [#allocation4], %s746
          %s748 = sand.u32 %s117, 1
          %s749 = smul.addr %s748, 4
          %s750 = scalar_lea.vmem [#allocation5], %s749
          %751 = dma.done %s747, 64
        $region52: #{tpu_custom_call.1} parent=47 // pred_fallthru
          _
      $region48: #{tpu_custom_call.1} parent=5 // pred_fallthru
        _
    $region6: #{tpu_custom_call.1} parent=1 // loop_footer
      %s18 = sadd.s32 1, %s14
    $region7: #{tpu_custom_call.1} parent=1 // loop_footer_branch
      %13 = sbr.rel target = $region3
    $region8: #{tpu_custom_call.1} parent=1 // loop_exit
      _
    %752 = vsyncpa [#allocation3], 1
    %s753 = scalar_lea.sflag [#allocation3], 1
    %754 = vsyncpa %s753, 1
    %755 = vsyncpa [#allocation4], 1
    %s756 = scalar_lea.sflag [#allocation4], 1
    %757 = vsyncpa %s756, 1

</llo_original>
